<compile_context>
chip_gen: v5e
topology: v5e:2x2
jax: 0.10.0
libtpu: 0.0.40
codegen_flags: <defaults>
</compile_context>

<pallas_src>
import functools

import jax
import jax.numpy as jnp
from jax.experimental import pallas as pl
from jax.experimental.pallas import tpu as pltpu

LN_EPS = 1e-5  # torch.nn.LayerNorm default eps

# VMEM accounting: every blocked input/output spec is double-buffered by the
# Pallas pipeliner, so the budget below is for (2 input + 2 output) buffers.
_PIPELINE_VMEM_BUDGET = 24 << 20   # bytes across all double-buffered blocks
_VMEM_LIMIT_BYTES = 32 << 20       # explicit scoped-VMEM limit, safe v5e..v7x


# --------------------------------------------------------------------------
# Fused single-pass kernel: pool + LayerNorm(C) + sigmoid + apply.
# --------------------------------------------------------------------------
def _fused_kernel(x_ref, g_ref, b_ref, o_ref, *, hw, c):
    # x_ref / o_ref: (G, C, HW)  (C on sublanes, HW on lanes)
    # g_ref / b_ref: (1, C, 1)   LayerNorm affine params
    xv = x_ref[...]
    # Global average pool: lane (XLU) reduction, accumulated in f32.
    pooled = jnp.sum(xv.astype(jnp.float32), axis=-1, keepdims=True) * (1.0 / hw)
    # LayerNorm over the channel axis (biased variance, like torch).
    mu = jnp.sum(pooled, axis=1, keepdims=True) * (1.0 / c)
    var = jnp.sum((pooled - mu) ** 2, axis=1, keepdims=True) * (1.0 / c)
    v = (pooled - mu) * jax.lax.rsqrt(var + LN_EPS)
    v = v * g_ref[...] + b_ref[...]
    gate = (1.0 / (1.0 + jnp.exp(-v))).astype(xv.dtype)      # (G, C, 1) in x.dtype
    o_ref[...] = (xv * gate).astype(o_ref.dtype)


# --------------------------------------------------------------------------
# Fallback streaming path (per-sample slab does not fit VMEM).
# --------------------------------------------------------------------------
def _scale_kernel(x_ref, g_ref, b_ref, scale_ref, acc_ref, *, hw, c, ts, mask_tail):
    # x_ref: (1, C, ts) spatial tile; scale_ref: (1, C, 1) resident over s.
    s = pl.program_id(1)

    @pl.when(s == 0)
    def _():
        acc_ref[...] = jnp.zeros_like(acc_ref)

    xv = x_ref[...].astype(jnp.float32)
    if mask_tail:
        # cdiv grid: mask padded lanes of the last partial spatial tile.
        lane = jax.lax.broadcasted_iota(jnp.int32, xv.shape, 2)
        xv = jnp.where(s * ts + lane < hw, xv, 0.0)
    acc_ref[...] += jnp.sum(xv, axis=-1, keepdims=True)

    @pl.when(s == pl.num_programs(1) - 1)
    def _():
        m = acc_ref[...] * (1.0 / hw)                             # pooled mean
        mu = jnp.sum(m, axis=1, keepdims=True) * (1.0 / c)
        var = jnp.sum((m - mu) ** 2, axis=1, keepdims=True) * (1.0 / c)
        v = (m - mu) * jax.lax.rsqrt(var + LN_EPS)
        v = v * g_ref[...] + b_ref[...]
        scale_ref[...] = (1.0 / (1.0 + jnp.exp(-v))).astype(scale_ref.dtype)


def _apply_kernel(x_ref, scale_ref, o_ref):
    # Gate is already in x.dtype -> no per-element promote/demote.
    o_ref[...] = (x_ref[...] * scale_ref[...]).astype(o_ref.dtype)


# --------------------------------------------------------------------------
# Block-size selection helpers (budget counts double-buffering + padding).
# --------------------------------------------------------------------------
def _padded_rows(c, itemsize):
    """Channel rows padded to a full sublane tile for this dtype."""
    rows = 8 * max(1, 4 // itemsize)          # 8 for f32, 16 for bf16, ...
    return -(-c // rows) * rows


def _samples_per_block(n, c, hw, itemsize):
    """Samples per fused block, or 0 if the fused path does not fit VMEM."""
    c_pad = _padded_rows(c, itemsize)
    hw_pad = -(-hw // 128) * 128
    per_sample = c_pad * hw_pad * itemsize
    max_g = _PIPELINE_VMEM_BUDGET // (4 * per_sample)     # 2 in + 2 out buffers
    if max_g < 1:
        return 0
    # Keep >= 2 grid steps when N >= 2 so both v7x TensorCores get work.
    cap = n if n == 1 else max(1, n // 2)
    g = int(min(max_g, cap))
    while n % g:                                          # largest divisor of n
        g -= 1
    return g


def _pick_spatial_tile(hw, c, itemsize):
    """128-multiple spatial tile for the streaming fallback (or full HW)."""
    c_pad = _padded_rows(c, itemsize)
    ts_max = _PIPELINE_VMEM_BUDGET // (4 * c_pad * itemsize)
    if hw <= ts_max:
        return hw
    return max(128, (ts_max // 128) * 128)


# --------------------------------------------------------------------------
# Public wrapper.
# --------------------------------------------------------------------------
def se_ln_forward(x_nchw, gamma, beta, *, spatial_tile=None, donate_x=False):
    """x_nchw: (N, C, H, W); gamma/beta: (C,) LayerNorm affine params."""
    N, C, H, W = x_nchw.shape
    HW = H * W
    x = x_nchw.reshape(N, C, HW)                 # free view of contiguous NCHW
    g = gamma.reshape(1, C, 1).astype(jnp.float32)
    b = beta.reshape(1, C, 1).astype(jnp.float32)
    aliases = {0: 0} if donate_x else {}

    # ---------------- fused single-pass path ----------------
    G = 0 if spatial_tile is not None else _samples_per_block(
        N, C, HW, x.dtype.itemsize)
    if G >= 1:
        out = pl.pallas_call(
            functools.partial(_fused_kernel, hw=HW, c=C),
            out_shape=jax.ShapeDtypeStruct((N, C, HW), x.dtype),
            grid_spec=pltpu.PrefetchScalarGridSpec(
                num_scalar_prefetch=0,
                grid=(N // G,),
                in_specs=[
                    pl.BlockSpec((G, C, HW), lambda i: (i, 0, 0)),
                    pl.BlockSpec((1, C, 1), lambda i: (0, 0, 0)),
                    pl.BlockSpec((1, C, 1), lambda i: (0, 0, 0)),
                ],
                out_specs=pl.BlockSpec((G, C, HW), lambda i: (i, 0, 0)),
            ),
            compiler_params=pltpu.CompilerParams(
                dimension_semantics=("parallel",),
                vmem_limit_bytes=_VMEM_LIMIT_BYTES),
            input_output_aliases=aliases,
        )(x, g, b)
        return out.reshape(N, C, H, W)

    # ---------------- streaming two-pass fallback ----------------
    ts = spatial_tile if spatial_tile is not None else _pick_spatial_tile(
        HW, C, x.dtype.itemsize)
    ts = min(ts, HW)
    if ts < HW:
        assert ts % 128 == 0, (
            "spatial_tile must be a multiple of 128 (or >= H*W)")
    S = pl.cdiv(HW, ts)
    mask_tail = (HW % ts) != 0

    # Pass 1: streamed global average pool + LayerNorm(C) + sigmoid -> gate.
    scale = pl.pallas_call(
        functools.partial(_scale_kernel, hw=HW, c=C, ts=ts, mask_tail=mask_tail),
        out_shape=jax.ShapeDtypeStruct((N, C, 1), x.dtype),
        grid_spec=pltpu.PrefetchScalarGridSpec(
            num_scalar_prefetch=0,
            grid=(N, S),
            in_specs=[
                pl.BlockSpec((1, C, ts), lambda n, s: (n, 0, s)),
                pl.BlockSpec((1, C, 1), lambda n, s: (0, 0, 0)),
                pl.BlockSpec((1, C, 1), lambda n, s: (0, 0, 0)),
            ],
            out_specs=pl.BlockSpec((1, C, 1), lambda n, s: (n, 0, 0)),
            scratch_shapes=[pltpu.VMEM((1, C, 1), jnp.float32)],
        ),
        compiler_params=pltpu.CompilerParams(
            dimension_semantics=("parallel", "arbitrary"),
            vmem_limit_bytes=_VMEM_LIMIT_BYTES),
    )(x, g, b)

    # Pass 2: broadcast the per-(n, c) gate over the spatial lanes.
    out = pl.pallas_call(
        _apply_kernel,
        out_shape=jax.ShapeDtypeStruct((N, C, HW), x.dtype),
        grid_spec=pltpu.PrefetchScalarGridSpec(
            num_scalar_prefetch=0,
            grid=(N, S),
            in_specs=[
                pl.BlockSpec((1, C, ts), lambda n, s: (n, 0, s)),
                pl.BlockSpec((1, C, 1), lambda n, s: (n, 0, 0)),
            ],
            out_specs=pl.BlockSpec((1, C, ts), lambda n, s: (n, 0, s)),
        ),
        compiler_params=pltpu.CompilerParams(
            dimension_semantics=("parallel", "parallel"),
            vmem_limit_bytes=_VMEM_LIMIT_BYTES),
        input_output_aliases=aliases,
    )(x, scale)

    return out.reshape(N, C, H, W)


def se_ln_reference(x, gamma, beta):
    """Pure-JAX reference mirroring the PyTorch SE_LN module."""
    m = x.mean(axis=(2, 3))                                     # (N, C) pool
    mu = m.mean(axis=-1, keepdims=True)
    var = ((m - mu) ** 2).mean(axis=-1, keepdims=True)          # biased (LN)
    s = (m - mu) / jnp.sqrt(var + LN_EPS)
    s = jax.nn.sigmoid(s * gamma[None, :] + beta[None, :])
    return x * s[:, :, None, None]


if __name__ == "__main__":
    key = jax.random.PRNGKey(0)
    k1, k2, k3, k4 = jax.random.split(key, 4)

    N, C, H, W = 2, 4, 16, 16
    x = jax.random.normal(k1, (N, C, H, W), jnp.float32)
    gamma = 1.0 + 0.1 * jax.random.normal(k2, (C,), jnp.float32)  # ln.weight
    beta = 0.1 * jax.random.normal(k3, (C,), jnp.float32)         # ln.bias

    ref = jax.block_until_ready(se_ln_reference(x, gamma, beta))

    # 1) Fused single-pass path (auto-picked G samples per block).
    out = jax.block_until_ready(se_ln_forward(x, gamma, beta))
    assert out.shape == (N, C, H, W), out.shape
    assert jnp.allclose(out, ref, atol=1e-4, rtol=1e-4), float(
        jnp.max(jnp.abs(out - ref)))

    # 2) Streaming fallback path, evenly-divided 128-lane spatial tiles.
    out = jax.block_until_ready(se_ln_forward(x, gamma, beta, spatial_tile=128))
    assert jnp.allclose(out, ref, atol=1e-4, rtol=1e-4), float(
        jnp.max(jnp.abs(out - ref)))

    # 3) Streaming fallback with a non-dividing spatial extent (H*W = 144,
    #    ts = 128 -> cdiv grid + masked last tile).
    x2 = jax.random.normal(k4, (N, C, 12, 12), jnp.float32)
    ref2 = jax.block_until_ready(se_ln_reference(x2, gamma, beta))
    out2 = jax.block_until_ready(se_ln_forward(x2, gamma, beta, spatial_tile=128))
    assert jnp.allclose(out2, ref2, atol=1e-4, rtol=1e-4), float(
        jnp.max(jnp.abs(out2 - ref2)))

    # 4) Fused path with the output aliased onto x's buffer.
    out = jax.block_until_ready(se_ln_forward(x, gamma, beta, donate_x=True))
    assert jnp.allclose(out, ref, atol=1e-4, rtol=1e-4), float(
        jnp.max(jnp.abs(out - ref)))

    print("KERNEL_OK")
</pallas_src>

<mosaic_0001>
module attributes {stable_mosaic.version = 11 : i64} {
  func.func @_fused_kernel(%arg0: i32, %arg1: memref<1x4x256xf32, #tpu.memory_space<vmem>>, %arg2: memref<1x4x1xf32, #tpu.memory_space<vmem>>, %arg3: memref<1x4x1xf32, #tpu.memory_space<vmem>>, %arg4: memref<1x4x256xf32, #tpu.memory_space<vmem>>) attributes {dimension_semantics = [#tpu.dimension_semantics<parallel>], iteration_bounds = array<i64: 2>, scalar_prefetch = 0 : i64, scratch_operands = 0 : i64, tpu.core_type = #tpu.core_type<tc>, window_params = [{transform_indices = @transform_0, window_bounds = array<i64: 1, 4, 256>}, {pipeline_mode = #tpu.pipeline_mode<synchronous>, transform_indices = @transform_1, window_bounds = array<i64: 1, 4, 1>}, {pipeline_mode = #tpu.pipeline_mode<synchronous>, transform_indices = @transform_2, window_bounds = array<i64: 1, 4, 1>}, {transform_indices = @transform_3, window_bounds = array<i64: 1, 4, 256>}]} {
    %c0 = arith.constant 0 : index
    %c0_0 = arith.constant 0 : index
    %c0_1 = arith.constant 0 : index
    %0 = vector.load %arg1[%c0, %c0_0, %c0_1] : memref<1x4x256xf32, #tpu.memory_space<vmem>>, vector<1x4x256xf32>
    %cst = arith.constant dense<0.000000e+00> : vector<1x4xf32>
    %1 = vector.multi_reduction <add>, %0, %cst [2] : vector<1x4x256xf32> to vector<1x4xf32>
    %2 = vector.shape_cast %1 : vector<1x4xf32> to vector<1x4x1xf32>
    %cst_2 = arith.constant 3.906250e-03 : f32
    %3 = vector.broadcast %cst_2 : f32 to vector<1x4x1xf32>
    %4 = arith.mulf %2, %3 : vector<1x4x1xf32>
    %cst_3 = arith.constant dense<0.000000e+00> : vector<1x1xf32>
    %5 = vector.multi_reduction <add>, %4, %cst_3 [1] : vector<1x4x1xf32> to vector<1x1xf32>
    %6 = vector.shape_cast %5 : vector<1x1xf32> to vector<1x1x1xf32>
    %cst_4 = arith.constant 2.500000e-01 : f32
    %7 = vector.broadcast %cst_4 : f32 to vector<1x1x1xf32>
    %8 = arith.mulf %6, %7 : vector<1x1x1xf32>
    %9 = vector.broadcast %8 : vector<1x1x1xf32> to vector<1x4x1xf32>
    %10 = arith.subf %4, %9 : vector<1x4x1xf32>
    %11 = arith.mulf %10, %10 : vector<1x4x1xf32>
    %cst_5 = arith.constant dense<0.000000e+00> : vector<1x1xf32>
    %12 = vector.multi_reduction <add>, %11, %cst_5 [1] : vector<1x4x1xf32> to vector<1x1xf32>
    %13 = vector.shape_cast %12 : vector<1x1xf32> to vector<1x1x1xf32>
    %cst_6 = arith.constant 2.500000e-01 : f32
    %14 = vector.broadcast %cst_6 : f32 to vector<1x1x1xf32>
    %15 = arith.mulf %13, %14 : vector<1x1x1xf32>
    %16 = vector.broadcast %8 : vector<1x1x1xf32> to vector<1x4x1xf32>
    %17 = arith.subf %4, %16 : vector<1x4x1xf32>
    %cst_7 = arith.constant 9.99999974E-6 : f32
    %18 = vector.broadcast %cst_7 : f32 to vector<1x1x1xf32>
    %19 = arith.addf %15, %18 : vector<1x1x1xf32>
    %20 = math.rsqrt %19 : vector<1x1x1xf32>
    %21 = vector.broadcast %20 : vector<1x1x1xf32> to vector<1x4x1xf32>
    %22 = arith.mulf %17, %21 : vector<1x4x1xf32>
    %c0_8 = arith.constant 0 : index
    %c0_9 = arith.constant 0 : index
    %c0_10 = arith.constant 0 : index
    %23 = vector.load %arg2[%c0_8, %c0_9, %c0_10] : memref<1x4x1xf32, #tpu.memory_space<vmem>>, vector<1x4x1xf32>
    %24 = arith.mulf %22, %23 : vector<1x4x1xf32>
    %c0_11 = arith.constant 0 : index
    %c0_12 = arith.constant 0 : index
    %c0_13 = arith.constant 0 : index
    %25 = vector.load %arg3[%c0_11, %c0_12, %c0_13] : memref<1x4x1xf32, #tpu.memory_space<vmem>>, vector<1x4x1xf32>
    %26 = arith.addf %24, %25 : vector<1x4x1xf32>
    %cst_14 = arith.constant 0.000000e+00 : f32
    %27 = vector.broadcast %cst_14 : f32 to vector<1x4x1xf32>
    %28 = arith.subf %27, %26 : vector<1x4x1xf32>
    %29 = math.exp %28 : vector<1x4x1xf32>
    %cst_15 = arith.constant 1.000000e+00 : f32
    %30 = vector.broadcast %cst_15 : f32 to vector<1x4x1xf32>
    %31 = arith.addf %30, %29 : vector<1x4x1xf32>
    %cst_16 = arith.constant 1.000000e+00 : f32
    %32 = vector.broadcast %cst_16 : f32 to vector<1x4x1xf32>
    %33 = arith.divf %32, %31 : vector<1x4x1xf32>
    %34 = vector.broadcast %33 : vector<1x4x1xf32> to vector<1x4x256xf32>
    %35 = arith.mulf %0, %34 : vector<1x4x256xf32>
    %c0_17 = arith.constant 0 : index
    %c0_18 = arith.constant 0 : index
    %c0_19 = arith.constant 0 : index
    %36 = vector.load %arg4[%c0_17, %c0_18, %c0_19] : memref<1x4x256xf32, #tpu.memory_space<vmem>>, vector<1x4x256xf32>
    tpu.vector_store %arg4[%c0_17, %c0_18, %c0_19], %35 {strides = array<i32>} : memref<1x4x256xf32, #tpu.memory_space<vmem>>, vector<1x4x256xf32>,
    return
  }
  func.func @transform_0(%arg0: i32) -> (i32, i32, i32) {
    %c0_i32 = arith.constant 0 : i32
    %c0_i32_0 = arith.constant 0 : i32
    %c0_i32_1 = arith.constant 0 : i32
    return %arg0, %c0_i32, %c0_i32_0 : i32, i32, i32
  }
  func.func @transform_1(%arg0: i32) -> (i32, i32, i32) {
    %c0_i32 = arith.constant 0 : i32
    %c0_i32_0 = arith.constant 0 : i32
    %c0_i32_1 = arith.constant 0 : i32
    %c0_i32_2 = arith.constant 0 : i32
    return %c0_i32, %c0_i32_0, %c0_i32_1 : i32, i32, i32
  }
  func.func @transform_2(%arg0: i32) -> (i32, i32, i32) {
    %c0_i32 = arith.constant 0 : i32
    %c0_i32_0 = arith.constant 0 : i32
    %c0_i32_1 = arith.constant 0 : i32
    %c0_i32_2 = arith.constant 0 : i32
    return %c0_i32, %c0_i32_0, %c0_i32_1 : i32, i32, i32
  }
  func.func @transform_3(%arg0: i32) -> (i32, i32, i32) {
    %c0_i32 = arith.constant 0 : i32
    %c0_i32_0 = arith.constant 0 : i32
    %c0_i32_1 = arith.constant 0 : i32
    return %arg0, %c0_i32, %c0_i32_0 : i32, i32, i32
  }
}

</mosaic_0001>

<llo_original>
// kernel: tpu_custom_call.1
$region0: #{tpu_custom_call.1}
  #allocation0 [shape = 'u32[]', space=smem, size = 0x4, offset = 0x4, fixed_abs, tag = 'smem constant byte address 0x4 - core index']
  #allocation1 [shape = 'u32[72,128]{1,0:T(1,128)}', space=vmem, size = 0x9000, scoped, tag = 'internal scratch']
  %s0 = inlined_call_operand.hbm [shape: f32[2,4,256], index: 0, kind: input, shape index: {}]
  %s1 = inlined_call_operand.vmem [shape: f32[1,4,1], index: 1, kind: input, shape index: {}]
  %s2 = inlined_call_operand.vmem [shape: f32[1,4,1], index: 2, kind: input, shape index: {}]
  %s3 = inlined_call_operand.hbm [shape: f32[2,4,256], index: 3, kind: output, shape index: {}]
  %s4 = sld [smem:[#allocation0]]
  $region49: #{tpu_custom_call.1} parent=0
    _
  %s6 = ssub.s32 1, %s4
  %s7 = scalar_select 0, %s6, %s4
  $region1: #{tpu_custom_call.1} parent=0
    #allocation2 [shape = 'u8[8192]{0}', space=vmem, size = 0x2000, scoped, tag = 'input window, operand 0']
    #allocation3 [shape = 's32[2]{0}', space=sflag, size = 0x8, scoped, tag = 'scoped memory for tpu_custom_call.1']
    #allocation4 [shape = 's32[2]{0}', space=sflag, size = 0x8, scoped, tag = 'scoped memory for tpu_custom_call.1']
    #allocation5 [shape = 'u8[8192]{0}', space=vmem, size = 0x2000, scoped, tag = 'output window, operand 0']
    %8 = vsyncpa [#allocation3], 0
    %s9 = scalar_lea.sflag [#allocation3], 1
    %10 = vsyncpa %s9, 0
    %11 = vsyncpa [#allocation4], 0
    %s12 = scalar_lea.sflag [#allocation4], 1
    %13 = vsyncpa %s12, 0
    loop: start=0, step=1, limit=4
    $region2: #{tpu_custom_call.1} parent=1 // loop_pre_header
      _
    $region3: #{tpu_custom_call.1} parent=1 // loop_header
      %s15 = sphi 0, %s19
      %p16 = scmp.ge.s32.totalorder %s15, 4
      %s25 = sphi 0, %s27
      %s28 = sphi 0, %s25
      %s29 = sphi 0, %s28
      %s45 = sphi 0, %s29
      %s49 = sphi 0, %s49
      %s51 = sphi 0, %s49
      %s52 = sphi 0, %s51
      %s66 = sphi 0, %s52
      %s70 = sphi 0, %s70
      %s72 = sphi 0, %s70
      %s73 = sphi 0, %s72
      %s87 = sphi 0, %s73
      %s93 = sphi 0, %s95
      %s96 = sphi 0, %s93
      %s97 = sphi 0, %s96
      %s113 = sphi 0, %s97
    $region4: #{tpu_custom_call.1} parent=1 // loop_header_branch
      %18 = sbr.rel (%p16) target = $region8
    $region5: #{tpu_custom_call.1} parent=1 // loop_body
      %s20 = ssub.s32 %s15, 1
      %s21 = ssub.s32 %s15, 2
      %s22 = sadd.s32 %s15, 1
      %s23 = ssub.s32 %s15, %s22
      %p24 = scmp.eq.s32.totalorder %s23, 0
      %s26 = sadd.s32 %s25, 1
      %s27 = scalar_select %p24, %s25, %s26
      %p30 = pneg %p24
      %p31 = scmp.eq.s32.totalorder %s15, 1
      %p32 = por %p30, %p31
      %p33 = scmp.ne.s32.totalorder %s25, %s28
      %p34 = scmp.eq.s32.totalorder %s15, 0
      %p35 = por %p33, %p34
      %p36 = scmp.ne.s32.totalorder %s25, %s28
      %p37 = scmp.eq.s32.totalorder %s20, 1
      %p38 = por %p36, %p37
      %p39 = scmp.ne.s32.totalorder %s28, %s29
      %p40 = scmp.eq.s32.totalorder %s20, 0
      %p41 = por %p39, %p40
      %p42 = scmp.ne.s32.totalorder %s28, %s29
      %p43 = scmp.eq.s32.totalorder %s21, 1
      %p44 = por %p42, %p43
      %p46 = scmp.ne.s32.totalorder %s29, %s45
      %p47 = scmp.eq.s32.totalorder %s21, 0
      %p48 = por %p46, %p47
      %s50 = sadd.s32 %s49, 1
      %p53 = scmp.eq.s32.totalorder %s15, 1
      %p54 = scmp.ne.s32.totalorder %s49, %s51
      %p55 = scmp.eq.s32.totalorder %s15, 0
      %p56 = por %p54, %p55
      %p57 = scmp.ne.s32.totalorder %s49, %s51
      %p58 = scmp.eq.s32.totalorder %s20, 1
      %p59 = por %p57, %p58
      %p60 = scmp.ne.s32.totalorder %s51, %s52
      %p61 = scmp.eq.s32.totalorder %s20, 0
      %p62 = por %p60, %p61
      %p63 = scmp.ne.s32.totalorder %s51, %s52
      %p64 = scmp.eq.s32.totalorder %s21, 1
      %p65 = por %p63, %p64
      %p67 = scmp.ne.s32.totalorder %s52, %s66
      %p68 = scmp.eq.s32.totalorder %s21, 0
      %p69 = por %p67, %p68
      %s71 = sadd.s32 %s70, 1
      %p74 = scmp.eq.s32.totalorder %s15, 1
      %p75 = scmp.ne.s32.totalorder %s70, %s72
      %p76 = scmp.eq.s32.totalorder %s15, 0
      %p77 = por %p75, %p76
      %p78 = scmp.ne.s32.totalorder %s70, %s72
      %p79 = scmp.eq.s32.totalorder %s20, 1
      %p80 = por %p78, %p79
      %p81 = scmp.ne.s32.totalorder %s72, %s73
      %p82 = scmp.eq.s32.totalorder %s20, 0
      %p83 = por %p81, %p82
      %p84 = scmp.ne.s32.totalorder %s72, %s73
      %p85 = scmp.eq.s32.totalorder %s21, 1
      %p86 = por %p84, %p85
      %p88 = scmp.ne.s32.totalorder %s73, %s87
      %p89 = scmp.eq.s32.totalorder %s21, 0
      %p90 = por %p88, %p89
      %s91 = ssub.s32 %s15, %s22
      %p92 = scmp.eq.s32.totalorder %s91, 0
      %s94 = sadd.s32 %s93, 1
      %s95 = scalar_select %p92, %s93, %s94
      %p98 = pneg %p92
      %p99 = scmp.eq.s32.totalorder %s15, 1
      %p100 = por %p98, %p99
      %p101 = scmp.ne.s32.totalorder %s93, %s96
      %p102 = scmp.eq.s32.totalorder %s15, 0
      %p103 = por %p101, %p102
      %p104 = scmp.ne.s32.totalorder %s93, %s96
      %p105 = scmp.eq.s32.totalorder %s20, 1
      %p106 = por %p104, %p105
      %p107 = scmp.ne.s32.totalorder %s96, %s97
      %p108 = scmp.eq.s32.totalorder %s20, 0
      %p109 = por %p107, %p108
      %p110 = scmp.ne.s32.totalorder %s96, %s97
      %p111 = scmp.eq.s32.totalorder %s21, 1
      %p112 = por %p110, %p111
      %p114 = scmp.ne.s32.totalorder %s97, %s113
      %p115 = scmp.eq.s32.totalorder %s21, 0
      %p116 = por %p114, %p115
      %p117 = scmp.le.s32.totalorder 1, %s15
      %p118 = scmp.lt.s32.totalorder %s15, 3
      %p119 = pnand %p117, %p118
      %p120 = pneg %p119
      // Predicated region
      $region9: #{tpu_custom_call.1} parent=5 // pred_check
        _
      $region10: #{tpu_custom_call.1} parent=5 // pred_check_branch
        %122 = sbr.rel (%p119) target = $region12
      $region11: #{tpu_custom_call.1} parent=5 // pred_region
        %s123 = ssub.s32 %s15, 1
        // Predicated region
        $region13: #{tpu_custom_call.1} parent=11 // pred_check
          %p124 = pneg %p62
        $region14: #{tpu_custom_call.1} parent=11 // pred_check_branch
          %126 = sbr.rel (%p124) target = $region16
        $region15: #{tpu_custom_call.1} parent=11 // pred_region
          _
        $region16: #{tpu_custom_call.1} parent=11 // pred_fallthru
          _
        // Predicated region
        $region17: #{tpu_custom_call.1} parent=11 // pred_check
          %p127 = pneg %p83
        $region18: #{tpu_custom_call.1} parent=11 // pred_check_branch
          %129 = sbr.rel (%p127) target = $region20
        $region19: #{tpu_custom_call.1} parent=11 // pred_region
          _
        $region20: #{tpu_custom_call.1} parent=11 // pred_fallthru
          _
      $region12: #{tpu_custom_call.1} parent=5 // pred_fallthru
        _
      %p130 = scmp.lt.s32.totalorder %s15, 2
      // Predicated region
      $region21: #{tpu_custom_call.1} parent=5 // pred_check
        %p131 = pneg %p130
      $region22: #{tpu_custom_call.1} parent=5 // pred_check_branch
        %133 = sbr.rel (%p131) target = $region24
      $region23: #{tpu_custom_call.1} parent=5 // pred_region
        // Predicated region
        $region25: #{tpu_custom_call.1} parent=23 // pred_check
          %p134 = pneg %p35
        $region26: #{tpu_custom_call.1} parent=23 // pred_check_branch
          %136 = sbr.rel (%p134) target = $region28
        $region27: #{tpu_custom_call.1} parent=23 // pred_region
          %s137 = sand.u32 %s25, 1
          %s138 = scalar_lea.sflag [#allocation3], %s137
          %s139 = sand.u32 %s25, 1
          %s140 = smul.addr %s139, 8
          %s141 = scalar_lea.vmem [#allocation2], %s140
          %143 = vsyncadd %s138, 0
          %s144 = smul.addr %s15, 2
          %s145 = smul.addr %s144, 4
          %s146 = scalar_lea.hbm %s0, %s145
          %s148 = sshll.u32 %s146, 4
          %s149 = int_to_ptr.hbm [resolvable:$true] %s148
          %s150 = sshll.u32 %s141, 4
          %s151 = int_to_ptr.vmem [resolvable:$true] %s150
          %153 = dma.hbm_to_vmem [thread:$0]  %s149, 128, %s151, %s138
        $region28: #{tpu_custom_call.1} parent=23 // pred_fallthru
          _
      $region24: #{tpu_custom_call.1} parent=5 // pred_fallthru
        _
      %p154 = scmp.le.s32.totalorder 1, %s15
      %p155 = scmp.lt.s32.totalorder %s15, 3
      %p156 = pnand %p154, %p155
      %p157 = pneg %p156
      // Predicated region
      $region29: #{tpu_custom_call.1} parent=5 // pred_check
        _
      $region30: #{tpu_custom_call.1} parent=5 // pred_check_branch
        %159 = sbr.rel (%p156) target = $region32
      $region31: #{tpu_custom_call.1} parent=5 // pred_region
        %s160 = ssub.s32 %s15, 1
        %s161 = sand.u32 %s28, 1
        %s162 = scalar_lea.sflag [#allocation3], %s161
        %s163 = sand.u32 %s28, 1
        %s164 = smul.addr %s163, 8
        %s165 = scalar_lea.vmem [#allocation2], %s164
        // Predicated region
        $region33: #{tpu_custom_call.1} parent=31 // pred_check
          %p166 = pneg %p41
        $region34: #{tpu_custom_call.1} parent=31 // pred_check_branch
          %168 = sbr.rel (%p166) target = $region36
        $region35: #{tpu_custom_call.1} parent=31 // pred_region
          %170 = dma.done %s162, 128
        $region36: #{tpu_custom_call.1} parent=31 // pred_fallthru
          _
        %s171 = sand.u32 %s28, 1
        %s172 = scalar_lea.sflag [#allocation3], %s171
        %s173 = sand.u32 %s28, 1
        %s174 = smul.addr %s173, 8
        %s175 = scalar_lea.vmem [#allocation2], %s174
        %p176 = pneg %p41
        %p177 = pneg %p38
        %p178 = pneg %p62
        %p179 = pneg %p59
        %p180 = pneg %p83
        %p181 = pneg %p80
        %p182 = pneg %p109
        %p183 = pneg %p106
        %s184 = sand.u32 %s96, 1
        %s185 = scalar_lea.sflag [#allocation4], %s184
        %s186 = sand.u32 %s96, 1
        %s187 = smul.addr %s186, 8
        %s188 = scalar_lea.vmem [#allocation5], %s187
        %v189 = vld [vmem:[%s165] sm:$0xff]
        %191 = vst [vmem:[#allocation1] ss:$2 sm:$0xff] %v189
        %v192 = vld.sshfl [vmem:[#allocation1] sm:$0xff pattern:$0x75316420]
        %v193 = vld.sshfl [vmem:[#allocation1 + $0x8] sm:$0xff pattern:$0x75316420]
        %vm196 = vcmask 1043456
        %v197 = vsel %vm196, %v192, 0.0
        %v198 = vsel %vm196, %v193, 0.0
        %v199 = vadd.f32 %v197, %v198
        %200 = vadd.xlane.f32.xlu0 %v199
        %v201 = vpop.xlane.xlu0 %200
        %v202 = vmul.f32 %v201, 0.00390625
        %v203 = vsel %vm196, %v202, 0.0
        %v204 = vrot.slane %v203, 4
        %v205 = vadd.f32 %v203, %v204
        %v206 = vrot.slane %v205, 2
        %v207 = vadd.f32 %v205, %v206
        %v208 = vrot.slane %v207, 1
        %v209 = vadd.f32 %v207, %v208
        %v210 = vmul.f32 %v209, 0.25
        %v211 = vsub.f32 %v202, %v210
        %v212 = vmul.f32 %v211, %v211
        %v213 = vsel %vm196, %v212, 0.0
        %v214 = vrot.slane %v213, 4
        %v215 = vadd.f32 %v213, %v214
        %v216 = vrot.slane %v215, 2
        %v217 = vadd.f32 %v215, %v216
        %v218 = vrot.slane %v217, 1
        %v219 = vadd.f32 %v217, %v218
        %v220 = vmul.f32 %v219, 0.25
        %v221 = vadd.f32 %v220, 1e-05
        %v222 = vrsqrt.pop %v221
        %v223 = vmul.f32 %v222, %v221
        %v224 = vmul.f32 %v223, %v222
        %v225 = vmul.f32 0.5, %v224
        %v226 = vsub.f32 1.5, %v225
        %v227 = vmul.f32 %v222, %v226
        %vm228 = vweird.f32 %v221
        %vm229 = vweird.f32 %v222
        %vm230 = vmor %vm228, %vm229
        %v231 = vsel %vm230, %v222, %v227
        %v232 = vmul.f32 %v211, %v231
        %v233 = vld [vmem:[%s1] sm:$0xf]
        %v234 = vmul.f32 %v232, %v233
        %v235 = vld [vmem:[%s2] sm:$0xf]
        %v236 = vadd.f32 %v234, %v235
        %v237 = vsub.f32 0.0, %v236
        %v238 = vmul.f32 %v237, 1.442695
        %v239 = vpow.pop %v238
        %v240 = vadd.f32 %v239, 1.0
        %v241 = vrcp.pop %v240
        %v242 = vmul.f32 %v240, %v241
        %v243 = vsub.f32 1.0, %v242
        %v244 = vmul.f32 %v241, %v243
        %v245 = vadd.f32 %v241, %v244
        %vm246 = vweird.f32 %v240
        %vm247 = vweird.f32 %v241
        %vm248 = vmor %vm246, %vm247
        %v249 = vsel %vm248, %v241, %v245
        %v250 = vand.u32 2147483647, %v240
        %vm251 = vcmp.eq.f32.partialorder %v250, 8.507059e+37
        %v252 = vand.u32 %v240, 2147483648
        %v253 = vor.u32 1.1754944e-38, %v252
        %v254 = vsel %vm251, %v253, %v249
        %v255 = vmul.f32 1.0, %v254
        %257 = vset.pattern.permute.xlu0 0
        %258 = vperm.xlu0 %257, %v255
        %v259 = vpop.permute.xlu0 %258
        %v261 = vunpack.c.l.s4 839922192
        %v262 = vunpack.c.0.s8 %v261
        %v263 = vperm.slane %v259, %v262
        %v265 = vmul.f32 %v189, %v263
        %266 = vst [vmem:[%s188] sm:$0xff] %v265
        %s267 = sand.u32 %s96, 1
        %s268 = scalar_lea.sflag [#allocation4], %s267
        %s269 = sand.u32 %s96, 1
        %s270 = smul.addr %s269, 8
        %s271 = scalar_lea.vmem [#allocation5], %s270
        // Predicated region
        $region37: #{tpu_custom_call.1} parent=31 // pred_check
          %p272 = pneg %p106
        $region38: #{tpu_custom_call.1} parent=31 // pred_check_branch
          %274 = sbr.rel (%p272) target = $region40
        $region39: #{tpu_custom_call.1} parent=31 // pred_region
          %276 = vsyncadd %s268, 0
          %s277 = smul.addr %s20, 2
          %s278 = smul.addr %s277, 4
          %s279 = scalar_lea.hbm %s3, %s278
          %s281 = sshll.u32 %s271, 4
          %s282 = int_to_ptr.vmem [resolvable:$true] %s281
          %s283 = sshll.u32 %s279, 4
          %s284 = int_to_ptr.hbm [resolvable:$true] %s283
          %286 = dma.vmem_to_hbm [thread:$0]  %s282, 128, %s284, %s268
        $region40: #{tpu_custom_call.1} parent=31 // pred_fallthru
          _
      $region32: #{tpu_custom_call.1} parent=5 // pred_fallthru
        _
      %p287 = scmp.le.s32.totalorder 2, %s15
      // Predicated region
      $region41: #{tpu_custom_call.1} parent=5 // pred_check
        %p288 = pneg %p287
      $region42: #{tpu_custom_call.1} parent=5 // pred_check_branch
        %290 = sbr.rel (%p288) target = $region44
      $region43: #{tpu_custom_call.1} parent=5 // pred_region
        %s291 = ssub.s32 %s15, 2
        // Predicated region
        $region45: #{tpu_custom_call.1} parent=43 // pred_check
          %p292 = pneg %p112
        $region46: #{tpu_custom_call.1} parent=43 // pred_check_branch
          %294 = sbr.rel (%p292) target = $region48
        $region47: #{tpu_custom_call.1} parent=43 // pred_region
          %s295 = sand.u32 %s97, 1
          %s296 = scalar_lea.sflag [#allocation4], %s295
          %s297 = sand.u32 %s97, 1
          %s298 = smul.addr %s297, 8
          %s299 = scalar_lea.vmem [#allocation5], %s298
          %301 = dma.done %s296, 128
        $region48: #{tpu_custom_call.1} parent=43 // pred_fallthru
          _
      $region44: #{tpu_custom_call.1} parent=5 // pred_fallthru
        _
    $region6: #{tpu_custom_call.1} parent=1 // loop_footer
      %s19 = sadd.s32 1, %s15
    $region7: #{tpu_custom_call.1} parent=1 // loop_footer_branch
      %14 = sbr.rel target = $region3
    $region8: #{tpu_custom_call.1} parent=1 // loop_exit
      _
    %302 = vsyncpa [#allocation3], 1
    %s303 = scalar_lea.sflag [#allocation3], 1
    %304 = vsyncpa %s303, 1
    %305 = vsyncpa [#allocation4], 1
    %s306 = scalar_lea.sflag [#allocation4], 1
    %307 = vsyncpa %s306, 1

</llo_original>
